<compile_context>
chip_gen: v6e
topology: v6e:2x2x1
jax: 0.10.0
libtpu: 0.0.40
codegen_flags: <defaults>
</compile_context>

<pallas_src>
import functools

import jax
import jax.numpy as jnp
from jax import lax
from jax.experimental import pallas as pl
from jax.experimental.pallas import tpu as pltpu


def _style_loss_kernel(x_ref, w_ref, gt_ref, out_ref, pool_acc_ref, *, s_rem):
    """Grid = (nb, ns); axis 1 (sequence) is the reduction axis (placed last).

    x_ref        : (tb, ts, H)  token features for this (b, s) tile (any dtype)
    w_ref        : (H, D)       projection weights, pre-scaled by 1/S (f32)
    gt_ref       : (tb, D)      ground-truth sentence embeddings
    out_ref      : (tb, D)      output: |pred - gt| for this batch tile
    pool_acc_ref : (tb, H)      f32 VMEM scratch: running token sum
    s_rem        : Python int   number of valid tokens in the LAST s tile
    """
    s = pl.program_id(1)
    ns = pl.num_programs(1)

    @pl.when(s == 0)
    def _():
        pool_acc_ref[...] = jnp.zeros_like(pool_acc_ref)

    @pl.when(s < ns - 1)
    def _():
        # Full interior tile: plain sum-pool, accumulated in f32 regardless of
        # the streaming dtype of x (bf16 stays bf16 on the wire / in VMEM).
        pool_acc_ref[...] += jnp.sum(x_ref[...], axis=1, dtype=jnp.float32)

    @pl.when(s == ns - 1)
    def _():
        x = x_ref[...]
        if s_rem < x.shape[1]:
            # Ragged last sequence tile: token rows past S are unspecified
            # (possibly NaN) because the block extends out of bounds -> zero
            # them with a static mask before pooling (exact for the L1 loss).
            tok = lax.broadcasted_iota(jnp.int32, x.shape, 1)
            x = jnp.where(tok < s_rem, x, jnp.zeros_like(x))
        pooled = pool_acc_ref[...] + jnp.sum(x, axis=1, dtype=jnp.float32)
        # (tb, H) @ (H, D) on the MXU; the 1/S mean scale is pre-folded into W.
        pred = jnp.dot(pooled, w_ref[...], preferred_element_type=jnp.float32)
        # Row-local |pred - gt|.  For the ragged last batch tile the garbage
        # rows land on out-of-bounds output rows and are dropped by the store.
        out_ref[...] = jnp.abs(pred - gt_ref[...].astype(jnp.float32))


def _round_up(n, m):
    return ((n + m - 1) // m) * m


def _vmem_buffer_bytes(shape, itemsize):
    """Approximate VMEM bytes of one buffer after layout padding
    (last dim -> 128 lanes, second-to-last -> 8 sublanes)."""
    s = list(shape)
    s[-1] = _round_up(s[-1], 128)
    if len(s) >= 2:
        s[-2] = _round_up(s[-2], 8)
    n = 1
    for d in s:
        n *= d
    return n * max(int(itemsize), 1)


def style_loss(x, w, gt, *, tb=None, max_ts=512, interpret=False):
    """Scalar L1 loss between the stand-in encoder output and `gt`.

    x  : (B, S, H)  token features (sentence_features[0]); streamed as-is
                    (pass bf16 if the upstream encoder emits bf16).
    w  : (H, D)     stand-in projection weights.
    gt : (B, D)     label sentence embeddings.
    """
    B, S, H = x.shape
    Hw, D = w.shape
    assert Hw == H and gt.shape == (B, D)

    # ---- physical VMEM on this chip (fallback: v7x's 64 MiB per core) ------
    vmem_cap = 64 * 1024 * 1024
    try:
        info = pltpu.get_tpu_info()
        vmem_cap = int(getattr(info, "vmem_capacity_bytes", vmem_cap))
    except Exception:
        pass

    # ---- sequence tile: multiple of 8 sublanes (or the full S) -------------
    if S <= max_ts:
        ts = S
    else:
        ts = max(8, (max_ts // 8) * 8)

    # ---- batch tile: multiple of 8 (or full B when B <= 8) -----------------
    # Bigger batch tiles on 128 MiB parts (v5e/v6e); for B > 8 cap the tile so
    # the parallel axis has >= 2 blocks, letting v7x megacore use both cores.
    if tb is None:
        if vmem_cap >= (100 << 20):
            tb = 32 if x.dtype.itemsize <= 2 else 16
        else:
            tb = 8
    if B <= 8:
        tb = B
    else:
        tb = max(8, min(int(tb), _round_up((B + 1) // 2, 8)))
        tb = (tb // 8) * 8

    # ---- fit the working set into a fraction of physical VMEM --------------
    def vmem_need(tb_, ts_):
        need = 2 * _vmem_buffer_bytes((tb_, ts_, H), x.dtype.itemsize)   # x (2-buf)
        need += 2 * _vmem_buffer_bytes((H, D), 4)                        # W (2-buf)
        need += 2 * _vmem_buffer_bytes((tb_, D), gt.dtype.itemsize)      # gt
        need += 2 * _vmem_buffer_bytes((tb_, D), 4)                      # out
        need += _vmem_buffer_bytes((tb_, H), 4)                          # pool acc
        return need

    budget = int(0.55 * vmem_cap)
    while vmem_need(tb, ts) > budget and tb > 8:
        tb = max(8, ((tb // 2) // 8) * 8)
    while vmem_need(tb, ts) > budget and ts > 8:
        ts = max(8, ((ts // 2) // 8) * 8)

    nb = pl.cdiv(B, tb)
    ns = pl.cdiv(S, ts)
    s_rem = S - (ns - 1) * ts          # static: valid tokens in the last S tile

    need = vmem_need(tb, ts)
    vmem_limit = min(max(need + (4 << 20), 16 << 20), int(0.625 * vmem_cap))
    vmem_limit = max(vmem_limit, need + (1 << 20))

    # Fold the 1/S mean-pool scale into W once (tiny array, negligible copy).
    w_scaled = w.astype(jnp.float32) * (1.0 / float(S))

    kernel = functools.partial(_style_loss_kernel, s_rem=s_rem)

    partial_abs = pl.pallas_call(
        kernel,
        out_shape=jax.ShapeDtypeStruct((B, D), jnp.float32),
        grid_spec=pltpu.PrefetchScalarGridSpec(
            num_scalar_prefetch=0,
            grid=(nb, ns),                                    # reduction axis last
            in_specs=[
                # x streams tile by tile in its native dtype; default double
                # buffering already covers compute for this single HBM stream.
                pl.BlockSpec((tb, ts, H), lambda b, s: (b, s, 0)),
                # W is resident (constant index map -> fetched once).
                pl.BlockSpec((H, D), lambda b, s: (0, 0)),
                pl.BlockSpec((tb, D), lambda b, s: (b, 0)),
            ],
            out_specs=pl.BlockSpec((tb, D), lambda b, s: (b, 0)),
            scratch_shapes=[pltpu.VMEM((tb, H), jnp.float32)],
        ),
        compiler_params=pltpu.CompilerParams(
            # b tiles are independent -> megacore-shardable; s accumulates.
            dimension_semantics=("parallel", "arbitrary"),
            vmem_limit_bytes=int(vmem_limit),
        ),
        interpret=interpret,
    )(x, w_scaled, gt)

    # Tiny final reduction on the (B, D) |pred - gt| slab (exact: no padding).
    return jnp.sum(partial_abs) * (1.0 / float(B * D))


if __name__ == "__main__":
    # Small but non-trivial shapes: ragged S tiles (S=20 with ts=8 -> 8+8+4),
    # a ragged B tile (B=12 with tb=8 -> 8+4), and non-multiple-of-128 H / D
    # handled as full-extent block dims (no HBM padding anywhere).
    B, S, H, D = 12, 20, 96, 64

    key = jax.random.PRNGKey(0)
    kx, kw, kg = jax.random.split(key, 3)

    x = jax.random.normal(kx, (B, S, H), dtype=jnp.float32)   # sentence_features[0]
    w = jax.random.normal(kw, (H, D), dtype=jnp.float32) / jnp.sqrt(float(H))
    gt = jax.random.normal(kg, (B, D), dtype=jnp.float32)     # labels

    # f32 path (max_ts=8 forces a multi-step S pipeline: ns=3, masked tail).
    loss = style_loss(x, w, gt, max_ts=8)
    jax.block_until_ready(loss)
    ref = jnp.mean(jnp.abs(jnp.mean(x, axis=1) @ w - gt))
    assert jnp.allclose(loss, ref, atol=1e-4, rtol=1e-4), (loss, ref)

    # bf16 streaming path (halves HBM bytes for x; accumulation stays f32).
    x_bf16 = x.astype(jnp.bfloat16)
    loss_bf16 = style_loss(x_bf16, w, gt, max_ts=8)
    jax.block_until_ready(loss_bf16)
    ref_bf16 = jnp.mean(jnp.abs(jnp.mean(x_bf16.astype(jnp.float32), axis=1) @ w - gt))
    assert jnp.allclose(loss_bf16, ref_bf16, atol=2e-3, rtol=2e-3), (loss_bf16, ref_bf16)

    print("KERNEL_OK")
</pallas_src>

<mosaic_0001>
module attributes {stable_mosaic.version = 11 : i64} {
  func.func @_style_loss_kernel(%arg0: i32, %arg1: i32, %arg2: memref<8x8x96xf32, #tpu.memory_space<vmem>>, %arg3: memref<96x64xf32, #tpu.memory_space<vmem>>, %arg4: memref<8x64xf32, #tpu.memory_space<vmem>>, %arg5: memref<8x64xf32, #tpu.memory_space<vmem>>, %arg6: memref<8x96xf32, #tpu.memory_space<vmem>>) attributes {dimension_semantics = [#tpu.dimension_semantics<parallel>, #tpu.dimension_semantics<arbitrary>], iteration_bounds = array<i64: 2, 3>, scalar_prefetch = 0 : i64, scratch_operands = 1 : i64, tpu.core_type = #tpu.core_type<tc>, window_params = [{transform_indices = @transform_0, window_bounds = array<i64: 8, 8, 96>}, {pipeline_mode = #tpu.pipeline_mode<synchronous>, transform_indices = @transform_1, window_bounds = array<i64: 96, 64>}, {transform_indices = @transform_2, window_bounds = array<i64: 8, 64>}, {transform_indices = @transform_3, window_bounds = array<i64: 8, 64>}]} {
    %c0_i32 = arith.constant 0 : i32
    %0 = arith.cmpi eq, %arg1, %c0_i32 : i32
    %1 = arith.extui %0 : i1 to i32
    %c0_i32_0 = arith.constant 0 : i32
    %2 = arith.cmpi ne, %1, %c0_i32_0 : i32
    scf.if %2 {
      %cst = arith.constant 0.000000e+00 : f32
      %9 = vector.broadcast %cst : f32 to vector<8x96xf32>
      %c0 = arith.constant 0 : index
      %c0_4 = arith.constant 0 : index
      %10 = vector.load %arg6[%c0, %c0_4] : memref<8x96xf32, #tpu.memory_space<vmem>>, vector<8x96xf32>
      tpu.vector_store %arg6[%c0, %c0_4], %9 {strides = array<i32>} : memref<8x96xf32, #tpu.memory_space<vmem>>, vector<8x96xf32>,
    } else {
    }
    %c2_i32 = arith.constant 2 : i32
    %3 = arith.cmpi slt, %arg1, %c2_i32 : i32
    %4 = arith.extui %3 : i1 to i32
    %c0_i32_1 = arith.constant 0 : i32
    %5 = arith.cmpi ne, %4, %c0_i32_1 : i32
    scf.if %5 {
      %c0 = arith.constant 0 : index
      %c0_4 = arith.constant 0 : index
      %9 = vector.load %arg6[%c0, %c0_4] : memref<8x96xf32, #tpu.memory_space<vmem>>, vector<8x96xf32>
      %c0_5 = arith.constant 0 : index
      %c0_6 = arith.constant 0 : index
      %c0_7 = arith.constant 0 : index
      %10 = vector.load %arg2[%c0_5, %c0_6, %c0_7] : memref<8x8x96xf32, #tpu.memory_space<vmem>>, vector<8x8x96xf32>
      %cst = arith.constant dense<0.000000e+00> : vector<8x96xf32>
      %11 = vector.multi_reduction <add>, %10, %cst [1] : vector<8x8x96xf32> to vector<8x96xf32>
      %12 = arith.addf %9, %11 : vector<8x96xf32>
      %c0_8 = arith.constant 0 : index
      %c0_9 = arith.constant 0 : index
      %13 = vector.load %arg6[%c0_8, %c0_9] : memref<8x96xf32, #tpu.memory_space<vmem>>, vector<8x96xf32>
      tpu.vector_store %arg6[%c0_8, %c0_9], %12 {strides = array<i32>} : memref<8x96xf32, #tpu.memory_space<vmem>>, vector<8x96xf32>,
    } else {
    }
    %c2_i32_2 = arith.constant 2 : i32
    %6 = arith.cmpi eq, %arg1, %c2_i32_2 : i32
    %7 = arith.extui %6 : i1 to i32
    %c0_i32_3 = arith.constant 0 : i32
    %8 = arith.cmpi ne, %7, %c0_i32_3 : i32
    scf.if %8 {
      %c0 = arith.constant 0 : index
      %c0_4 = arith.constant 0 : index
      %c0_5 = arith.constant 0 : index
      %9 = vector.load %arg2[%c0, %c0_4, %c0_5] : memref<8x8x96xf32, #tpu.memory_space<vmem>>, vector<8x8x96xf32>
      %10 = tpu.iota {dimensions = array<i32: 1>} : vector<8x8x96xi32>
      %c4_i32 = arith.constant 4 : i32
      %11 = vector.broadcast %c4_i32 : i32 to vector<8x8x96xi32>
      %12 = arith.cmpi slt, %10, %11 : vector<8x8x96xi32>
      %cst = arith.constant 0.000000e+00 : f32
      %13 = vector.broadcast %cst : f32 to vector<8x8x96xf32>
      %14 = arith.select %12, %9, %13 : vector<8x8x96xi1>, vector<8x8x96xf32>
      %c0_6 = arith.constant 0 : index
      %c0_7 = arith.constant 0 : index
      %15 = vector.load %arg6[%c0_6, %c0_7] : memref<8x96xf32, #tpu.memory_space<vmem>>, vector<8x96xf32>
      %cst_8 = arith.constant dense<0.000000e+00> : vector<8x96xf32>
      %16 = vector.multi_reduction <add>, %14, %cst_8 [1] : vector<8x8x96xf32> to vector<8x96xf32>
      %17 = arith.addf %15, %16 : vector<8x96xf32>
      %c0_9 = arith.constant 0 : index
      %c0_10 = arith.constant 0 : index
      %18 = vector.load %arg3[%c0_9, %c0_10] : memref<96x64xf32, #tpu.memory_space<vmem>>, vector<96x64xf32>
      %cst_11 = arith.constant dense<0.000000e+00> : vector<8x64xf32>
      %19 = tpu.matmul %17, %18, %cst_11 {dimension_numbers = #tpu.dot_dimension_numbers<[1], [0], [0], [1], [0, 0, 1, 1], [], []>} : vector<8x96xf32>, vector<96x64xf32>, vector<8x64xf32> -> vector<8x64xf32>
      %c0_12 = arith.constant 0 : index
      %c0_13 = arith.constant 0 : index
      %20 = vector.load %arg4[%c0_12, %c0_13] : memref<8x64xf32, #tpu.memory_space<vmem>>, vector<8x64xf32>
      %21 = arith.subf %19, %20 : vector<8x64xf32>
      %22 = math.absf %21 : vector<8x64xf32>
      %c0_14 = arith.constant 0 : index
      %c0_15 = arith.constant 0 : index
      %23 = vector.load %arg5[%c0_14, %c0_15] : memref<8x64xf32, #tpu.memory_space<vmem>>, vector<8x64xf32>
      tpu.vector_store %arg5[%c0_14, %c0_15], %22 {strides = array<i32>} : memref<8x64xf32, #tpu.memory_space<vmem>>, vector<8x64xf32>,
    } else {
    }
    return
  }
  func.func @transform_0(%arg0: i32, %arg1: i32) -> (i32, i32, i32) {
    %c0_i32 = arith.constant 0 : i32
    %c0_i32_0 = arith.constant 0 : i32
    return %arg0, %arg1, %c0_i32 : i32, i32, i32
  }
  func.func @transform_1(%arg0: i32, %arg1: i32) -> (i32, i32) {
    %c0_i32 = arith.constant 0 : i32
    %c0_i32_0 = arith.constant 0 : i32
    %c0_i32_1 = arith.constant 0 : i32
    return %c0_i32, %c0_i32_0 : i32, i32
  }
  func.func @transform_2(%arg0: i32, %arg1: i32) -> (i32, i32) {
    %c0_i32 = arith.constant 0 : i32
    %c0_i32_0 = arith.constant 0 : i32
    return %arg0, %c0_i32 : i32, i32
  }
  func.func @transform_3(%arg0: i32, %arg1: i32) -> (i32, i32) {
    %c0_i32 = arith.constant 0 : i32
    %c0_i32_0 = arith.constant 0 : i32
    return %arg0, %c0_i32 : i32, i32
  }
}

</mosaic_0001>

<llo_original>
// kernel: tpu_custom_call.1
$region0: #{tpu_custom_call.1}
  #allocation0 [shape = 'u32[]', space=smem, size = 0x4, offset = 0x4, fixed_abs, tag = 'smem constant byte address 0x4 - core index']
  #allocation1 [shape = 'u32[144,128]{1,0:T(1,128)}', space=vmem, size = 0x12000, scoped, tag = 'internal scratch']
  #allocation2 [shape = 'f32[8,96]{1,0:T(8,128)}', space=vmem, size = 0x1000, scoped, tag = 'scratch operand']
  %s0 = inlined_call_operand.hbm [shape: f32[12,20,96], index: 0, kind: input, shape index: {}]
  %s1 = inlined_call_operand.vmem [shape: f32[96,64], index: 1, kind: input, shape index: {}]
  %s2 = inlined_call_operand.vmem [shape: f32[12,64], index: 2, kind: input, shape index: {}]
  %s3 = inlined_call_operand.hbm [shape: f32[12,64], index: 3, kind: output, shape index: {}]
  %s4 = sld [smem:[#allocation0]]
  $region61: #{tpu_custom_call.1} parent=0
    _
  %s6 = ssub.s32 1, %s4
  %s7 = scalar_select 0, %s6, %s4
  $region1: #{tpu_custom_call.1} parent=0
    #allocation3 [shape = 'u8[65536]{0}', space=vmem, size = 0x10000, scoped, tag = 'input window, operand 0']
    #allocation4 [shape = 's32[2]{0}', space=sflag, size = 0x8, scoped, tag = 'scoped memory for tpu_custom_call.1']
    #allocation5 [shape = 's32[2]{0}', space=sflag, size = 0x8, scoped, tag = 'scoped memory for tpu_custom_call.1']
    #allocation6 [shape = 'u8[8192]{0}', space=vmem, size = 0x2000, scoped, tag = 'output window, operand 0']
    %8 = vsyncpa [#allocation4], 0
    %s9 = scalar_lea.sflag [#allocation4], 1
    %10 = vsyncpa %s9, 0
    %11 = vsyncpa [#allocation5], 0
    %s12 = scalar_lea.sflag [#allocation5], 1
    %13 = vsyncpa %s12, 0
    loop: start=0, step=1, limit=8
    $region2: #{tpu_custom_call.1} parent=1 // loop_pre_header
      _
    $region3: #{tpu_custom_call.1} parent=1 // loop_header
      %s15 = sphi 0, %s19
      %p16 = scmp.ge.s32.totalorder %s15, 8
      %s22 = sphi 0, %s34
      %s23 = sphi 0, %s30
      %s24 = sphi 0, %s22
      %s25 = sphi 0, %s23
      %s26 = sphi 0, %s24
      %s27 = sphi 0, %s25
      %s39 = sphi 0, %s41
      %s42 = sphi 0, %s39
      %s43 = sphi 0, %s42
      %s59 = sphi 0, %s43
      %s63 = sphi 0, %s63
      %s65 = sphi 0, %s63
      %s66 = sphi 0, %s65
      %s80 = sphi 0, %s66
      %s86 = sphi 0, %s88
      %s89 = sphi 0, %s86
      %s90 = sphi 0, %s89
      %s106 = sphi 0, %s90
      %s112 = sphi 0, %s114
      %s115 = sphi 0, %s112
      %s116 = sphi 0, %s115
      %s132 = sphi 0, %s116
    $region4: #{tpu_custom_call.1} parent=1 // loop_header_branch
      %18 = sbr.rel (%p16) target = $region8
    $region5: #{tpu_custom_call.1} parent=1 // loop_body
      %s20 = ssub.s32 %s15, 1
      %s21 = ssub.s32 %s15, 2
      %s28 = sadd.s32 1, %s23
      %p29 = scmp.ge.s32.totalorder %s28, 3
      %s30 = scalar_select %p29, 0, %s28
      %s31 = sadd.s32 1, %s22
      %s32 = scalar_select %p29, %s31, %s22
      %p33 = scmp.ge.s32.totalorder %s32, 2
      %s34 = scalar_select %p33, 0, %s32
      %s35 = ssub.s32 %s22, %s34
      %s36 = ssub.s32 %s23, %s30
      %s37 = sor.u32 %s35, %s36
      %p38 = scmp.eq.s32.totalorder %s37, 0
      %s40 = sadd.s32 %s39, 1
      %s41 = scalar_select %p38, %s39, %s40
      %p44 = pneg %p38
      %p45 = scmp.eq.s32.totalorder %s15, 5
      %p46 = por %p44, %p45
      %p47 = scmp.ne.s32.totalorder %s39, %s42
      %p48 = scmp.eq.s32.totalorder %s15, 0
      %p49 = por %p47, %p48
      %p50 = scmp.ne.s32.totalorder %s39, %s42
      %p51 = scmp.eq.s32.totalorder %s20, 5
      %p52 = por %p50, %p51
      %p53 = scmp.ne.s32.totalorder %s42, %s43
      %p54 = scmp.eq.s32.totalorder %s20, 0
      %p55 = por %p53, %p54
      %p56 = scmp.ne.s32.totalorder %s42, %s43
      %p57 = scmp.eq.s32.totalorder %s21, 5
      %p58 = por %p56, %p57
      %p60 = scmp.ne.s32.totalorder %s43, %s59
      %p61 = scmp.eq.s32.totalorder %s21, 0
      %p62 = por %p60, %p61
      %s64 = sadd.s32 %s63, 1
      %p67 = scmp.eq.s32.totalorder %s15, 5
      %p68 = scmp.ne.s32.totalorder %s63, %s65
      %p69 = scmp.eq.s32.totalorder %s15, 0
      %p70 = por %p68, %p69
      %p71 = scmp.ne.s32.totalorder %s63, %s65
      %p72 = scmp.eq.s32.totalorder %s20, 5
      %p73 = por %p71, %p72
      %p74 = scmp.ne.s32.totalorder %s65, %s66
      %p75 = scmp.eq.s32.totalorder %s20, 0
      %p76 = por %p74, %p75
      %p77 = scmp.ne.s32.totalorder %s65, %s66
      %p78 = scmp.eq.s32.totalorder %s21, 5
      %p79 = por %p77, %p78
      %p81 = scmp.ne.s32.totalorder %s66, %s80
      %p82 = scmp.eq.s32.totalorder %s21, 0
      %p83 = por %p81, %p82
      %s84 = ssub.s32 %s22, %s34
      %p85 = scmp.eq.s32.totalorder %s84, 0
      %s87 = sadd.s32 %s86, 1
      %s88 = scalar_select %p85, %s86, %s87
      %p91 = pneg %p85
      %p92 = scmp.eq.s32.totalorder %s15, 5
      %p93 = por %p91, %p92
      %p94 = scmp.ne.s32.totalorder %s86, %s89
      %p95 = scmp.eq.s32.totalorder %s15, 0
      %p96 = por %p94, %p95
      %p97 = scmp.ne.s32.totalorder %s86, %s89
      %p98 = scmp.eq.s32.totalorder %s20, 5
      %p99 = por %p97, %p98
      %p100 = scmp.ne.s32.totalorder %s89, %s90
      %p101 = scmp.eq.s32.totalorder %s20, 0
      %p102 = por %p100, %p101
      %p103 = scmp.ne.s32.totalorder %s89, %s90
      %p104 = scmp.eq.s32.totalorder %s21, 5
      %p105 = por %p103, %p104
      %p107 = scmp.ne.s32.totalorder %s90, %s106
      %p108 = scmp.eq.s32.totalorder %s21, 0
      %p109 = por %p107, %p108
      %s110 = ssub.s32 %s22, %s34
      %p111 = scmp.eq.s32.totalorder %s110, 0
      %s113 = sadd.s32 %s112, 1
      %s114 = scalar_select %p111, %s112, %s113
      %p117 = pneg %p111
      %p118 = scmp.eq.s32.totalorder %s15, 5
      %p119 = por %p117, %p118
      %p120 = scmp.ne.s32.totalorder %s112, %s115
      %p121 = scmp.eq.s32.totalorder %s15, 0
      %p122 = por %p120, %p121
      %p123 = scmp.ne.s32.totalorder %s112, %s115
      %p124 = scmp.eq.s32.totalorder %s20, 5
      %p125 = por %p123, %p124
      %p126 = scmp.ne.s32.totalorder %s115, %s116
      %p127 = scmp.eq.s32.totalorder %s20, 0
      %p128 = por %p126, %p127
      %p129 = scmp.ne.s32.totalorder %s115, %s116
      %p130 = scmp.eq.s32.totalorder %s21, 5
      %p131 = por %p129, %p130
      %p133 = scmp.ne.s32.totalorder %s116, %s132
      %p134 = scmp.eq.s32.totalorder %s21, 0
      %p135 = por %p133, %p134
      %p136 = scmp.le.s32.totalorder 1, %s15
      %p137 = scmp.lt.s32.totalorder %s15, 7
      %p138 = pnand %p136, %p137
      %p139 = pneg %p138
      // Predicated region
      $region9: #{tpu_custom_call.1} parent=5 // pred_check
        _
      $region10: #{tpu_custom_call.1} parent=5 // pred_check_branch
        %141 = sbr.rel (%p138) target = $region12
      $region11: #{tpu_custom_call.1} parent=5 // pred_region
        %s142 = ssub.s32 %s15, 1
        // Predicated region
        $region13: #{tpu_custom_call.1} parent=11 // pred_check
          %p143 = pneg %p76
        $region14: #{tpu_custom_call.1} parent=11 // pred_check_branch
          %145 = sbr.rel (%p143) target = $region16
        $region15: #{tpu_custom_call.1} parent=11 // pred_region
          _
        $region16: #{tpu_custom_call.1} parent=11 // pred_fallthru
          _
      $region12: #{tpu_custom_call.1} parent=5 // pred_fallthru
        _
      %p146 = scmp.lt.s32.totalorder %s15, 6
      // Predicated region
      $region17: #{tpu_custom_call.1} parent=5 // pred_check
        %p147 = pneg %p146
      $region18: #{tpu_custom_call.1} parent=5 // pred_check_branch
        %149 = sbr.rel (%p147) target = $region20
      $region19: #{tpu_custom_call.1} parent=5 // pred_region
        // Predicated region
        $region21: #{tpu_custom_call.1} parent=19 // pred_check
          %p150 = pneg %p49
        $region22: #{tpu_custom_call.1} parent=19 // pred_check_branch
          %152 = sbr.rel (%p150) target = $region24
        $region23: #{tpu_custom_call.1} parent=19 // pred_region
          %s153 = sand.u32 %s39, 1
          %s154 = scalar_lea.sflag [#allocation4], %s153
          %s155 = sand.u32 %s39, 1
          %s156 = smul.addr %s155, 64
          %s157 = scalar_lea.vmem [#allocation3], %s156
          %s158 = smul.u32 8, %s22
          %s159 = ssub.s32 12, %s158
          %p160 = scmp.lt.s32.totalorder %s159, 8
          %s161 = scalar_select %p160, %s159, 8
          %s162 = smul.u32 128, %s161
          %s164 = ssub.s32 1024, %s162
          %165 = vsyncadd %s154, %s164
          %p166 = scmp.ne.s32.totalorder 0, %s162
          %s167 = smul.addr %s158, 3
          %s168 = sadd.s32 %s23, %s167
          %s169 = smul.addr %s168, 128
          %s170 = scalar_lea.hbm %s0, %s169
          %s171 = smul.u32 8, %s161
          %s172 = sshll.u32 %s157, 4
          %s173 = int_to_ptr.vmem [resolvable:$true] %s172
          %s174 = sshll.u32 %s171, 4
          %178 = dma.hbm_to_vmem [thread:$0]  (%p166), %s170, %s174, %s173, %s154, 384, 128, 8
        $region24: #{tpu_custom_call.1} parent=19 // pred_fallthru
          _
        // Predicated region
        $region25: #{tpu_custom_call.1} parent=19 // pred_check
          %p179 = pneg %p96
        $region26: #{tpu_custom_call.1} parent=19 // pred_check_branch
          %181 = sbr.rel (%p179) target = $region28
        $region27: #{tpu_custom_call.1} parent=19 // pred_region
          %p182 = scmp.lt.s32.totalorder %s22, 1
          %s183 = scalar_select %p182, %s22, 1
          %s184 = smul.addr %s183, 8
          %s185 = scalar_lea.vmem %s2, %s184
        $region28: #{tpu_custom_call.1} parent=19 // pred_fallthru
          _
      $region20: #{tpu_custom_call.1} parent=5 // pred_fallthru
        _
      %p186 = scmp.le.s32.totalorder 1, %s15
      %p187 = scmp.lt.s32.totalorder %s15, 7
      %p188 = pnand %p186, %p187
      %p189 = pneg %p188
      // Predicated region
      $region29: #{tpu_custom_call.1} parent=5 // pred_check
        _
      $region30: #{tpu_custom_call.1} parent=5 // pred_check_branch
        %191 = sbr.rel (%p188) target = $region32
      $region31: #{tpu_custom_call.1} parent=5 // pred_region
        %s192 = ssub.s32 %s15, 1
        %s193 = sand.u32 %s42, 1
        %s194 = scalar_lea.sflag [#allocation4], %s193
        %s195 = sand.u32 %s42, 1
        %s196 = smul.addr %s195, 64
        %s197 = scalar_lea.vmem [#allocation3], %s196
        // Predicated region
        $region33: #{tpu_custom_call.1} parent=31 // pred_check
          %p198 = pneg %p55
        $region34: #{tpu_custom_call.1} parent=31 // pred_check_branch
          %200 = sbr.rel (%p198) target = $region36
        $region35: #{tpu_custom_call.1} parent=31 // pred_region
          %201 = dma.done %s194, 1024
        $region36: #{tpu_custom_call.1} parent=31 // pred_fallthru
          _
        %s202 = sand.u32 %s42, 1
        %s203 = scalar_lea.sflag [#allocation4], %s202
        %s204 = sand.u32 %s42, 1
        %s205 = smul.addr %s204, 64
        %s206 = scalar_lea.vmem [#allocation3], %s205
        %p207 = pneg %p55
        %p208 = pneg %p52
        %p209 = pneg %p76
        %p210 = pneg %p73
        %p211 = scmp.lt.s32.totalorder %s24, 1
        %s212 = scalar_select %p211, %s24, 1
        %s213 = smul.addr %s212, 8
        %s214 = scalar_lea.vmem %s2, %s213
        %p215 = pneg %p102
        %p216 = pneg %p99
        %p217 = pneg %p128
        %p218 = pneg %p125
        %s219 = sand.u32 %s115, 1
        %s220 = scalar_lea.sflag [#allocation5], %s219
        %s221 = sand.u32 %s115, 1
        %s222 = smul.addr %s221, 8
        %s223 = scalar_lea.vmem [#allocation6], %s222
        %s224 = smul.u32 8, %s24
        %s225 = ssub.s32 12, %s224
        %p226 = scmp.lt.s32.totalorder %s225, 8
        %s227 = scalar_select %p226, %s225, 8
        %s228 = smul.u32 128, %s227
        %p229 = scmp.lt.s32.totalorder %s24, 1
        %s230 = scalar_select %p229, %s24, 1
        %s231 = smul.addr %s230, 8
        %s232 = scalar_lea.vmem %s2, %s231
        %p233 = scmp.eq.s32.totalorder %s25, 0
        // Predicated region
        $region37: #{tpu_custom_call.1} parent=31 // pred_check
          %p234 = pneg %p233
        $region38: #{tpu_custom_call.1} parent=31 // pred_check_branch
          %236 = sbr.rel (%p234) target = $region40
        $region39: #{tpu_custom_call.1} parent=31 // pred_region
          %vm237 = vcmask 785408
          %238 = vst.msk [vmem:[#allocation2] sm:$0xff] %vm237, 0.0
        $region40: #{tpu_custom_call.1} parent=31 // pred_fallthru
          _
        %p239 = scmp.lt.s32.totalorder %s25, 2
        // Predicated region
        $region41: #{tpu_custom_call.1} parent=31 // pred_check
          %p240 = pneg %p239
        $region42: #{tpu_custom_call.1} parent=31 // pred_check_branch
          %242 = sbr.rel (%p240) target = $region44
        $region43: #{tpu_custom_call.1} parent=31 // pred_region
          %v243 = vld [vmem:[#allocation2] sm:$0xff]
          %v244 = vld [vmem:[%s197] sm:$0xff]
          %v245 = vld [vmem:[%s197 + $0x8] sm:$0xff]
          %v246 = vld [vmem:[%s197 + $0x10] sm:$0xff]
          %v247 = vld [vmem:[%s197 + $0x18] sm:$0xff]
          %v248 = vld [vmem:[%s197 + $0x20] sm:$0xff]
          %v249 = vld [vmem:[%s197 + $0x28] sm:$0xff]
          %v250 = vld [vmem:[%s197 + $0x30] sm:$0xff]
          %v251 = vld [vmem:[%s197 + $0x38] sm:$0xff]
          %vm252 = vcmask 785408
          %v253 = vsel %vm252, %v244, 0.0
          %v254 = vrot.slane %v253, 4
          %v255 = vadd.f32 %v253, %v254
          %v256 = vrot.slane %v255, 2
          %v257 = vadd.f32 %v255, %v256
          %v258 = vrot.slane %v257, 1
          %v259 = vadd.f32 %v257, %v258
          %v260 = vsel %vm252, %v245, 0.0
          %v261 = vrot.slane %v260, 4
          %v262 = vadd.f32 %v260, %v261
          %v263 = vrot.slane %v262, 2
          %v264 = vadd.f32 %v262, %v263
          %v265 = vrot.slane %v264, 1
          %v266 = vadd.f32 %v264, %v265
          %v267 = vsel %vm252, %v246, 0.0
          %v268 = vrot.slane %v267, 4
          %v269 = vadd.f32 %v267, %v268
          %v270 = vrot.slane %v269, 2
          %v271 = vadd.f32 %v269, %v270
          %v272 = vrot.slane %v271, 1
          %v273 = vadd.f32 %v271, %v272
          %v274 = vsel %vm252, %v247, 0.0
          %v275 = vrot.slane %v274, 4
          %v276 = vadd.f32 %v274, %v275
          %v277 = vrot.slane %v276, 2
          %v278 = vadd.f32 %v276, %v277
          %v279 = vrot.slane %v278, 1
          %v280 = vadd.f32 %v278, %v279
          %v281 = vsel %vm252, %v248, 0.0
          %v282 = vrot.slane %v281, 4
          %v283 = vadd.f32 %v281, %v282
          %v284 = vrot.slane %v283, 2
          %v285 = vadd.f32 %v283, %v284
          %v286 = vrot.slane %v285, 1
          %v287 = vadd.f32 %v285, %v286
          %v288 = vsel %vm252, %v249, 0.0
          %v289 = vrot.slane %v288, 4
          %v290 = vadd.f32 %v288, %v289
          %v291 = vrot.slane %v290, 2
          %v292 = vadd.f32 %v290, %v291
          %v293 = vrot.slane %v292, 1
          %v294 = vadd.f32 %v292, %v293
          %v295 = vsel %vm252, %v250, 0.0
          %v296 = vrot.slane %v295, 4
          %v297 = vadd.f32 %v295, %v296
          %v298 = vrot.slane %v297, 2
          %v299 = vadd.f32 %v297, %v298
          %v300 = vrot.slane %v299, 1
          %v301 = vadd.f32 %v299, %v300
          %v302 = vsel %vm252, %v251, 0.0
          %v303 = vrot.slane %v302, 4
          %v304 = vadd.f32 %v302, %v303
          %v305 = vrot.slane %v304, 2
          %v306 = vadd.f32 %v304, %v305
          %v307 = vrot.slane %v306, 1
          %v308 = vadd.f32 %v306, %v307
          %vm317 = vcmask 1041409
          %v318 = vsel %vm317, %v266, %v259
          %vm319 = vcmask 1042434
          %v320 = vsel %vm319, %v273, %v318
          %vm321 = vcmask 1043459
          %v322 = vsel %vm321, %v280, %v320
          %vm323 = vcmask 1044484
          %v324 = vsel %vm323, %v287, %v322
          %vm325 = vcmask 1045509
          %v326 = vsel %vm325, %v294, %v324
          %vm327 = vcmask 1046534
          %v328 = vsel %vm327, %v301, %v326
          %vm329 = vcmask 1047559
          %v330 = vsel %vm329, %v308, %v328
          %v332 = vadd.f32 %v243, %v330
          %333 = vst.msk [vmem:[#allocation2] sm:$0xff] %vm252, %v332
        $region44: #{tpu_custom_call.1} parent=31 // pred_fallthru
          _
        %p334 = scmp.eq.s32.totalorder %s25, 2
        // Predicated region
        $region45: #{tpu_custom_call.1} parent=31 // pred_check
          %p335 = pneg %p334
        $region46: #{tpu_custom_call.1} parent=31 // pred_check_branch
          %337 = sbr.rel (%p335) target = $region48
        $region47: #{tpu_custom_call.1} parent=31 // pred_region
          %v338 = vld [vmem:[%s197] sm:$0xff]
          %v339 = vld [vmem:[%s197 + $0x8] sm:$0xff]
          %v340 = vld [vmem:[%s197 + $0x10] sm:$0xff]
          %v341 = vld [vmem:[%s197 + $0x18] sm:$0xff]
          %v342 = vld [vmem:[%s197 + $0x20] sm:$0xff]
          %v343 = vld [vmem:[%s197 + $0x28] sm:$0xff]
          %v344 = vld [vmem:[%s197 + $0x30] sm:$0xff]
          %v345 = vld [vmem:[%s197 + $0x38] sm:$0xff]
          %v346 = vlaneseq
          %v347 = vshrl.u32 %v346, 7
          %vm348 = vcmp.lt.s32.totalorder %v347, 4
          %v349 = vsel %vm348, %v338, 0.0
          %v350 = vsel %vm348, %v339, 0.0
          %v351 = vsel %vm348, %v340, 0.0
          %v352 = vsel %vm348, %v341, 0.0
          %v353 = vsel %vm348, %v342, 0.0
          %v354 = vsel %vm348, %v343, 0.0
          %v355 = vsel %vm348, %v344, 0.0
          %v356 = vsel %vm348, %v345, 0.0
          %v357 = vld [vmem:[#allocation2] sm:$0xff]
          %vm358 = vcmask 785408
          %v359 = vsel %vm358, %v349, 0.0
          %v360 = vrot.slane %v359, 4
          %v361 = vadd.f32 %v359, %v360
          %v362 = vrot.slane %v361, 2
          %v363 = vadd.f32 %v361, %v362
          %v364 = vrot.slane %v363, 1
          %v365 = vadd.f32 %v363, %v364
          %v366 = vsel %vm358, %v350, 0.0
          %v367 = vrot.slane %v366, 4
          %v368 = vadd.f32 %v366, %v367
          %v369 = vrot.slane %v368, 2
          %v370 = vadd.f32 %v368, %v369
          %v371 = vrot.slane %v370, 1
          %v372 = vadd.f32 %v370, %v371
          %v373 = vsel %vm358, %v351, 0.0
          %v374 = vrot.slane %v373, 4
          %v375 = vadd.f32 %v373, %v374
          %v376 = vrot.slane %v375, 2
          %v377 = vadd.f32 %v375, %v376
          %v378 = vrot.slane %v377, 1
          %v379 = vadd.f32 %v377, %v378
          %v380 = vsel %vm358, %v352, 0.0
          %v381 = vrot.slane %v380, 4
          %v382 = vadd.f32 %v380, %v381
          %v383 = vrot.slane %v382, 2
          %v384 = vadd.f32 %v382, %v383
          %v385 = vrot.slane %v384, 1
          %v386 = vadd.f32 %v384, %v385
          %v387 = vsel %vm358, %v353, 0.0
          %v388 = vrot.slane %v387, 4
          %v389 = vadd.f32 %v387, %v388
          %v390 = vrot.slane %v389, 2
          %v391 = vadd.f32 %v389, %v390
          %v392 = vrot.slane %v391, 1
          %v393 = vadd.f32 %v391, %v392
          %v394 = vsel %vm358, %v354, 0.0
          %v395 = vrot.slane %v394, 4
          %v396 = vadd.f32 %v394, %v395
          %v397 = vrot.slane %v396, 2
          %v398 = vadd.f32 %v396, %v397
          %v399 = vrot.slane %v398, 1
          %v400 = vadd.f32 %v398, %v399
          %v401 = vsel %vm358, %v355, 0.0
          %v402 = vrot.slane %v401, 4
          %v403 = vadd.f32 %v401, %v402
          %v404 = vrot.slane %v403, 2
          %v405 = vadd.f32 %v403, %v404
          %v406 = vrot.slane %v405, 1
          %v407 = vadd.f32 %v405, %v406
          %v408 = vsel %vm358, %v356, 0.0
          %v409 = vrot.slane %v408, 4
          %v410 = vadd.f32 %v408, %v409
          %v411 = vrot.slane %v410, 2
          %v412 = vadd.f32 %v410, %v411
          %v413 = vrot.slane %v412, 1
          %v414 = vadd.f32 %v412, %v413
          %vm423 = vcmask 1041409
          %v424 = vsel %vm423, %v372, %v365
          %vm425 = vcmask 1042434
          %v426 = vsel %vm425, %v379, %v424
          %vm427 = vcmask 1043459
          %v428 = vsel %vm427, %v386, %v426
          %vm429 = vcmask 1044484
          %v430 = vsel %vm429, %v393, %v428
          %vm431 = vcmask 1045509
          %v432 = vsel %vm431, %v400, %v430
          %vm433 = vcmask 1046534
          %v434 = vsel %vm433, %v407, %v432
          %vm435 = vcmask 1047559
          %v436 = vsel %vm435, %v414, %v434
          %v438 = vadd.f32 %v357, %v436
          %v439 = vld [vmem:[%s1] sm:$0xff]
          %v440 = vld [vmem:[%s1 + $0x8] sm:$0xff]
          %v441 = vld [vmem:[%s1 + $0x10] sm:$0xff]
          %v442 = vld [vmem:[%s1 + $0x18] sm:$0xff]
          %v443 = vld [vmem:[%s1 + $0x20] sm:$0xff]
          %v444 = vld [vmem:[%s1 + $0x28] sm:$0xff]
          %v445 = vld [vmem:[%s1 + $0x30] sm:$0xff]
          %v446 = vld [vmem:[%s1 + $0x38] sm:$0xff]
          %v447 = vld [vmem:[%s1 + $0x40] sm:$0xff]
          %v448 = vld [vmem:[%s1 + $0x48] sm:$0xff]
          %v449 = vld [vmem:[%s1 + $0x50] sm:$0xff]
          %v450 = vld [vmem:[%s1 + $0x58] sm:$0xff]
          %v452 = vsel %vm358, %v438, 0
          %454 = vmatprep.subr.mxu0 0.0
          %455 = vmatpush1.msra.mxu0 0.0
          %456 = vmatprep.subr.mxu0 0.0
          %457 = vmatpush1.msra.mxu0 0.0
          %458 = vmatprep.subr.mxu0 0.0
          %459 = vmatpush1.msra.mxu0 0.0
          %460 = vmatprep.subr.mxu0 0.0
          %461 = vmatpush1.msra.mxu0 0.0
          %462 = vmatprep.subr.mxu0 0.0
          %463 = vmatpush1.msra.mxu0 %v450
          %464 = vmatprep.subr.mxu0 0.0
          %465 = vmatpush1.msra.mxu0 %v449
          %466 = vmatprep.subr.mxu0 0.0
          %467 = vmatpush1.msra.mxu0 %v448
          %468 = vmatprep.subr.mxu0 0.0
          %469 = vmatpush1.msra.mxu0 %v447
          %470 = vmatprep.subr.mxu0 0.0
          %471 = vmatpush1.msra.mxu0 %v446
          %472 = vmatprep.subr.mxu0 0.0
          %473 = vmatpush1.msra.mxu0 %v445
          %474 = vmatprep.subr.mxu0 0.0
          %475 = vmatpush1.msra.mxu0 %v444
          %476 = vmatprep.subr.mxu0 0.0
          %477 = vmatpush1.msra.mxu0 %v443
          %478 = vmatprep.subr.mxu0 0.0
          %479 = vmatpush1.msra.mxu0 %v442
          %480 = vmatprep.subr.mxu0 0.0
          %481 = vmatpush1.msra.mxu0 %v441
          %482 = vmatprep.subr.mxu0 0.0
          %483 = vmatpush1.msra.mxu0 %v440
          %484 = vmatprep.subr.mxu0 0.0
          %485 = vmatpush1.msra.mxu0 %v439
          %486 = vmatprep.subr.mxu0 0.0
          %487 = vmatpush2.msra.mxu0 0.0
          %488 = vmatprep.subr.mxu0 0.0
          %489 = vmatpush2.msra.mxu0 0.0
          %490 = vmatprep.subr.mxu0 0.0
          %491 = vmatpush2.msra.mxu0 0.0
          %492 = vmatprep.subr.mxu0 0.0
          %493 = vmatpush2.msra.mxu0 0.0
          %494 = vmatprep.subr.mxu0 0.0
          %495 = vmatpush2.msra.mxu0 0.0
          %496 = vmatprep.subr.mxu0 0.0
          %497 = vmatpush2.msra.mxu0 0.0
          %498 = vmatprep.subr.mxu0 0.0
          %499 = vmatpush2.msra.mxu0 0.0
          %500 = vmatprep.subr.mxu0 0.0
          %501 = vmatpush2.msra.mxu0 0.0
          %502 = vmatprep.subr.mxu0 0.0
          %503 = vmatpush2.msra.mxu0 0.0
          %504 = vmatprep.subr.mxu0 0.0
          %505 = vmatpush2.msra.mxu0 0.0
          %506 = vmatprep.subr.mxu0 0.0
          %507 = vmatpush2.msra.mxu0 0.0
          %508 = vmatprep.subr.mxu0 0.0
          %509 = vmatpush2.msra.mxu0 0.0
          %510 = vmatprep.subr.mxu0 0.0
          %511 = vmatpush2.msra.mxu0 0.0
          %512 = vmatprep.subr.mxu0 0.0
          %513 = vmatpush2.msra.mxu0 0.0
          %514 = vmatprep.subr.mxu0 0.0
          %515 = vmatpush2.msra.mxu0 0.0
          %516 = vmatprep.subr.mxu0 0.0
          %517 = vmatpush2.msra.mxu0 0.0
          %518 = vmatprep.mubr.f32.mxu0 0.0
          %519 = vmatmul.mubr.f32.gmra.mxu0 %v452
          %v520 = vpop.f32.mrf.mxu0
          %v521 = vadd.f32 0.0, %v520
          %v522 = vpop.f32.mrf.mxu0
          %523 = vdwg.mxu0
          %v524 = vld [vmem:[%s232] sm:$0xff]
          %v525 = vsub.f32 %v521, %v524
          %v526 = vand.u32 2147483647, %v525
          %vm527 = vcmask 523264
          %528 = vst.msk [vmem:[%s223] sm:$0xff] %vm527, %v526
        $region48: #{tpu_custom_call.1} parent=31 // pred_fallthru
          _
        %s529 = sand.u32 %s115, 1
        %s530 = scalar_lea.sflag [#allocation5], %s529
        %s531 = sand.u32 %s115, 1
        %s532 = smul.addr %s531, 8
        %s533 = scalar_lea.vmem [#allocation6], %s532
        // Predicated region
        $region49: #{tpu_custom_call.1} parent=31 // pred_check
          %p534 = pneg %p125
        $region50: #{tpu_custom_call.1} parent=31 // pred_check_branch
          %536 = sbr.rel (%p534) target = $region52
        $region51: #{tpu_custom_call.1} parent=31 // pred_region
          %s538 = ssub.s32 128, 128
          %539 = vsyncadd %s530, %s538
          %s540 = smul.addr %s24, 128
          %s541 = scalar_lea.hbm %s3, %s540
          %s543 = sshll.u32 %s533, 4
          %s544 = int_to_ptr.vmem [resolvable:$true] %s543
          %546 = dma.vmem_to_hbm [thread:$0]  %s544, 128, %s541, %s530
        $region52: #{tpu_custom_call.1} parent=31 // pred_fallthru
          _
      $region32: #{tpu_custom_call.1} parent=5 // pred_fallthru
        _
      %p547 = scmp.le.s32.totalorder 2, %s15
      // Predicated region
      $region53: #{tpu_custom_call.1} parent=5 // pred_check
        %p548 = pneg %p547
      $region54: #{tpu_custom_call.1} parent=5 // pred_check_branch
        %550 = sbr.rel (%p548) target = $region56
      $region55: #{tpu_custom_call.1} parent=5 // pred_region
        %s551 = ssub.s32 %s15, 2
        // Predicated region
        $region57: #{tpu_custom_call.1} parent=55 // pred_check
          %p552 = pneg %p131
        $region58: #{tpu_custom_call.1} parent=55 // pred_check_branch
          %554 = sbr.rel (%p552) target = $region60
        $region59: #{tpu_custom_call.1} parent=55 // pred_region
          %s555 = sand.u32 %s116, 1
          %s556 = scalar_lea.sflag [#allocation5], %s555
          %s557 = sand.u32 %s116, 1
          %s558 = smul.addr %s557, 8
          %s559 = scalar_lea.vmem [#allocation6], %s558
          %560 = dma.done %s556, 128
        $region60: #{tpu_custom_call.1} parent=55 // pred_fallthru
          _
      $region56: #{tpu_custom_call.1} parent=5 // pred_fallthru
        _
    $region6: #{tpu_custom_call.1} parent=1 // loop_footer
      %s19 = sadd.s32 1, %s15
    $region7: #{tpu_custom_call.1} parent=1 // loop_footer_branch
      %14 = sbr.rel target = $region3
    $region8: #{tpu_custom_call.1} parent=1 // loop_exit
      _
    %561 = vsyncpa [#allocation4], 1
    %s562 = scalar_lea.sflag [#allocation4], 1
    %563 = vsyncpa %s562, 1
    %564 = vsyncpa [#allocation5], 1
    %s565 = scalar_lea.sflag [#allocation5], 1
    %566 = vsyncpa %s565, 1

</llo_original>
